<compile_context>
chip_gen: v7x
topology: tpu7x:2x2x1
jax: 0.10.0
libtpu: 0.0.40
codegen_flags: <defaults>
</compile_context>

<pallas_src>
import jax
import jax.numpy as jnp
from jax.experimental import pallas as pl
from jax.experimental.pallas import tpu as pltpu

_MIN_PALLAS_BATCH = 512   # below this, pallas_call is pure launch overhead -> XLA path
_MAX_BLOCK_M = 4096       # rows per batch tile (amortizes ~0.35 us per grid step)
_HIDDEN_PAD = 128         # hidden dims padded 100 -> 128 (exact, zero padding)


def _round_up(x, m):
    return ((x + m - 1) // m) * m


def fcnn_kernel(x_ref, w1_ref, b1_ref, w2_ref, b2_ref,
                w3_ref, b3_ref, w4_ref, b4_ref, o_ref):
    cdt = w1_ref.dtype  # MXU operand dtype (bf16 or f32); accumulation is f32

    # x stays f32 in HBM; cast the tile here (hidden under the MXU) instead of
    # a separate XLA convert kernel on the wrapper side.
    x = x_ref[...].astype(cdt)

    # layer1 + relu  (normalization (x - mean)/std already folded into w1/b1)
    h = jnp.dot(x, w1_ref[...], preferred_element_type=jnp.float32) + b1_ref[...]
    h = jnp.maximum(h, 0.0)
    # layer2 + relu
    h = jnp.dot(h.astype(cdt), w2_ref[...],
                preferred_element_type=jnp.float32) + b2_ref[...]
    h = jnp.maximum(h, 0.0)
    # layer3 + relu
    h = jnp.dot(h.astype(cdt), w3_ref[...],
                preferred_element_type=jnp.float32) + b3_ref[...]
    h = jnp.maximum(h, 0.0)
    # layer4 (no activation).  output_dim < 128 lanes -> masked vst; output
    # bytes are negligible here.  If a profile ever shows the MXU slot binding,
    # this 10->4 layer can be moved to 10 broadcast FMAs on the VPU, and the
    # output can be presented as a lane-dense slab (both gated on profiling).
    o_ref[...] = (jnp.dot(h.astype(cdt), w4_ref[...],
                          preferred_element_type=jnp.float32)
                  + b4_ref[...]).astype(o_ref.dtype)


def prepare_fcnn_params(params, mean, std_dev, compute_dtype=jnp.bfloat16):
    """One-time prep (NOT on the hot path):
       sanitize std (0 -> 1), fold normalization into layer1, transpose weights
       to (in, out), zero-pad hidden 100 -> 128, cast matmul operands."""
    f32 = jnp.float32
    input_dim = params["w1"].shape[1]
    h1 = params["w1"].shape[0]        # 100
    h3 = params["w3"].shape[0]        # 10
    output_dim = params["w4"].shape[0]

    std_safe = jnp.where(std_dev == 0, 1.0, std_dev).astype(f32)
    mean_f = mean.astype(f32)

    # torch Linear: y = x @ W.T + b, W is (out, in) -> transpose to (in, out).
    w1t = params["w1"].T.astype(f32)  # (input_dim, 100)
    w2t = params["w2"].T.astype(f32)  # (100, 100)
    w3t = params["w3"].T.astype(f32)  # (100, 10)
    w4t = params["w4"].T.astype(f32)  # (10, output_dim)

    # Fold (x - mean)/std into layer1 (exact):
    #   ((x - mean)/std) @ w1t + b1 == x @ (w1t/std[:,None]) + (b1 - (mean/std) @ w1t)
    w1_eff = w1t / std_safe[:, None]
    b1_eff = params["b1"].astype(f32) - (mean_f / std_safe) @ w1t

    H = _HIDDEN_PAD
    w1p = jnp.zeros((input_dim, H), f32).at[:, :h1].set(w1_eff)
    b1p = jnp.zeros((H,), f32).at[:h1].set(b1_eff)
    w2p = jnp.zeros((H, H), f32).at[:h1, :h1].set(w2t)
    b2p = jnp.zeros((H,), f32).at[:h1].set(params["b2"].astype(f32))
    w3p = jnp.zeros((H, h3), f32).at[:h1, :].set(w3t)
    b3p = params["b3"].astype(f32)
    w4p = w4t
    b4p = params["b4"].astype(f32)

    cdt = compute_dtype
    return (w1p.astype(cdt), b1p.reshape(1, H),
            w2p.astype(cdt), b2p.reshape(1, H),
            w3p.astype(cdt), b3p.reshape(1, h3),
            w4p.astype(cdt), b4p.reshape(1, output_dim))


@jax.jit
def _xla_forward(x, prepared):
    """Small-batch fast path: same folded math, fused by XLA, no pallas_call."""
    w1, b1, w2, b2, w3, b3, w4, b4 = prepared
    cdt = w1.dtype
    h = jnp.maximum(jnp.dot(x.astype(cdt), w1,
                            preferred_element_type=jnp.float32) + b1, 0.0)
    h = jnp.maximum(jnp.dot(h.astype(cdt), w2,
                            preferred_element_type=jnp.float32) + b2, 0.0)
    h = jnp.maximum(jnp.dot(h.astype(cdt), w3,
                            preferred_element_type=jnp.float32) + b3, 0.0)
    return jnp.dot(h.astype(cdt), w4, preferred_element_type=jnp.float32) + b4


@jax.jit
def _pallas_forward(x, prepared):
    """x: (batch, input_dim) float32; prepared: output of prepare_fcnn_params."""
    w1, b1, w2, b2, w3, b3, w4, b4 = prepared
    batch, input_dim = x.shape
    hidden = w2.shape[1]
    mid = w3.shape[1]
    output_dim = w4.shape[1]

    # Tile selection: tiles up to _MAX_BLOCK_M rows amortize per-step overhead;
    # always use >= 2 (even) grid steps so the "parallel" batch axis can be
    # sharded across both TensorCores on v7x (harmless on v5e/v6e).
    num_tiles = max(2, pl.cdiv(batch, _MAX_BLOCK_M))
    if num_tiles % 2:
        num_tiles += 1
    tm = min(_round_up(pl.cdiv(batch, num_tiles), 8), _round_up(batch, 8))
    grid = (pl.cdiv(batch, tm),)

    def resident(shape):
        # Same block index every grid step -> fetched once, stays VMEM-resident.
        # (pipeline_mode=pl.Buffered(1) would drop the second buffer; savings
        #  are negligible for these few-hundred-KB blocks, so not used.)
        return pl.BlockSpec(shape, lambda i: (0, 0))

    flops = 2 * batch * (input_dim * hidden + hidden * hidden
                         + hidden * mid + mid * output_dim)
    bytes_accessed = (x.size * x.dtype.itemsize
                      + batch * output_dim * 4
                      + sum(a.size * a.dtype.itemsize for a in prepared))

    return pl.pallas_call(
        fcnn_kernel,
        out_shape=jax.ShapeDtypeStruct((batch, output_dim), jnp.float32),
        grid_spec=pltpu.PrefetchScalarGridSpec(
            num_scalar_prefetch=0,
            grid=grid,
            in_specs=[
                pl.BlockSpec((tm, input_dim), lambda i: (i, 0)),
                resident(w1.shape), resident(b1.shape),
                resident(w2.shape), resident(b2.shape),
                resident(w3.shape), resident(b3.shape),
                resident(w4.shape), resident(b4.shape),
            ],
            out_specs=pl.BlockSpec((tm, output_dim), lambda i: (i, 0)),
        ),
        compiler_params=pltpu.CompilerParams(
            dimension_semantics=("parallel",)),
        cost_estimate=pl.CostEstimate(
            flops=flops, transcendentals=0, bytes_accessed=bytes_accessed),
    )(x, *prepared)


def fcnn_forward(x, prepared):
    """FCNN forward.  Dispatch: tiny batches -> fused XLA; otherwise Pallas."""
    if x.shape[0] < _MIN_PALLAS_BATCH:
        return _xla_forward(x, prepared)
    return _pallas_forward(x, prepared)


def init_params(key, input_dim, output_dim):
    dims = [(100, input_dim), (100, 100), (10, 100), (output_dim, 10)]
    params = {}
    keys = jax.random.split(key, 2 * len(dims))
    for i, (out_d, in_d) in enumerate(dims):
        bound = 1.0 / jnp.sqrt(in_d)
        params[f"w{i+1}"] = jax.random.uniform(
            keys[2 * i], (out_d, in_d), jnp.float32, -bound, bound)
        params[f"b{i+1}"] = jax.random.uniform(
            keys[2 * i + 1], (out_d,), jnp.float32, -bound, bound)
    return params


# TODO(synk): save()/load() (torch.save / pickle persistence) has no Pallas
# equivalent and is intentionally not implemented.

if __name__ == "__main__":
    input_dim, output_dim = 16, 4

    key = jax.random.PRNGKey(0)
    kx1, kx2, kp, km, ks = jax.random.split(key, 5)

    params = init_params(kp, input_dim, output_dim)
    mean = jax.random.normal(km, (input_dim,), jnp.float32)
    std = jax.random.uniform(ks, (input_dim,), jnp.float32, 0.5, 2.0)
    std = std.at[0].set(0.0)  # exercise the std_dev == 0 -> 1.0 path

    def reference(x):
        # Original-module math (un-folded, un-padded, f32).
        std_safe = jnp.where(std == 0, 1.0, std)
        h = (x - mean) / std_safe
        h = jnp.maximum(h @ params["w1"].T + params["b1"], 0.0)
        h = jnp.maximum(h @ params["w2"].T + params["b2"], 0.0)
        h = jnp.maximum(h @ params["w3"].T + params["b3"], 0.0)
        return h @ params["w4"].T + params["b4"]

    # --- f32 kernel, small batch: exact semantic check vs the original module ---
    x_small = jax.random.normal(kx1, (8, input_dim), jnp.float32)
    prep_f32 = prepare_fcnn_params(params, mean, std, compute_dtype=jnp.float32)
    out_small = _pallas_forward(x_small, prep_f32)   # force the Pallas path
    jax.block_until_ready(out_small)
    assert jnp.allclose(out_small, reference(x_small), atol=1e-4, rtol=1e-4), \
        "f32 Pallas kernel mismatch vs reference"

    # Dispatcher fast path (small batch -> fused XLA, no pallas_call).
    out_fast = fcnn_forward(x_small, prep_f32)
    jax.block_until_ready(out_fast)
    assert jnp.allclose(out_fast, reference(x_small), atol=1e-4, rtol=1e-4), \
        "XLA fast-path mismatch vs reference"

    # --- bf16 kernel, multi-tile batch: validate against the f32 reference ---
    x_big = jax.random.normal(kx2, (2048, input_dim), jnp.float32)
    prep_bf16 = prepare_fcnn_params(params, mean, std, compute_dtype=jnp.bfloat16)
    out_big = fcnn_forward(x_big, prep_bf16)          # 2048 rows -> Pallas path
    jax.block_until_ready(out_big)
    ref_big = reference(x_big)
    max_err = float(jnp.max(jnp.abs(out_big - ref_big)))
    assert max_err < 0.1, f"bf16 kernel error vs f32 reference too large: {max_err}"

    print("KERNEL_OK")
</pallas_src>

<mosaic_0001>
module attributes {stable_mosaic.version = 11 : i64} {
  func.func @fcnn_kernel(%arg0: i32, %arg1: memref<8x16xf32, #tpu.memory_space<vmem>>, %arg2: memref<16x128xf32, #tpu.memory_space<vmem>>, %arg3: memref<1x128xf32, #tpu.memory_space<vmem>>, %arg4: memref<128x128xf32, #tpu.memory_space<vmem>>, %arg5: memref<1x128xf32, #tpu.memory_space<vmem>>, %arg6: memref<128x10xf32, #tpu.memory_space<vmem>>, %arg7: memref<1x10xf32, #tpu.memory_space<vmem>>, %arg8: memref<10x4xf32, #tpu.memory_space<vmem>>, %arg9: memref<1x4xf32, #tpu.memory_space<vmem>>, %arg10: memref<8x4xf32, #tpu.memory_space<vmem>>) attributes {dimension_semantics = [#tpu.dimension_semantics<parallel>], iteration_bounds = array<i64: 1>, scalar_prefetch = 0 : i64, scratch_operands = 0 : i64, tpu.core_type = #tpu.core_type<tc>, window_params = [{transform_indices = @transform_0, window_bounds = array<i64: 8, 16>}, {pipeline_mode = #tpu.pipeline_mode<synchronous>, transform_indices = @transform_1, window_bounds = array<i64: 16, 128>}, {pipeline_mode = #tpu.pipeline_mode<synchronous>, transform_indices = @transform_2, window_bounds = array<i64: 1, 128>}, {pipeline_mode = #tpu.pipeline_mode<synchronous>, transform_indices = @transform_3, window_bounds = array<i64: 128, 128>}, {pipeline_mode = #tpu.pipeline_mode<synchronous>, transform_indices = @transform_4, window_bounds = array<i64: 1, 128>}, {pipeline_mode = #tpu.pipeline_mode<synchronous>, transform_indices = @transform_5, window_bounds = array<i64: 128, 10>}, {pipeline_mode = #tpu.pipeline_mode<synchronous>, transform_indices = @transform_6, window_bounds = array<i64: 1, 10>}, {pipeline_mode = #tpu.pipeline_mode<synchronous>, transform_indices = @transform_7, window_bounds = array<i64: 10, 4>}, {pipeline_mode = #tpu.pipeline_mode<synchronous>, transform_indices = @transform_8, window_bounds = array<i64: 1, 4>}, {transform_indices = @transform_9, window_bounds = array<i64: 8, 4>}]} {
    %c0 = arith.constant 0 : index
    %c0_0 = arith.constant 0 : index
    %0 = vector.load %arg1[%c0, %c0_0] : memref<8x16xf32, #tpu.memory_space<vmem>>, vector<8x16xf32>
    %c0_1 = arith.constant 0 : index
    %c0_2 = arith.constant 0 : index
    %1 = vector.load %arg2[%c0_1, %c0_2] : memref<16x128xf32, #tpu.memory_space<vmem>>, vector<16x128xf32>
    %cst = arith.constant dense<0.000000e+00> : vector<8x128xf32>
    %2 = tpu.matmul %0, %1, %cst {dimension_numbers = #tpu.dot_dimension_numbers<[1], [0], [0], [1], [0, 0, 1, 1], [], []>} : vector<8x16xf32>, vector<16x128xf32>, vector<8x128xf32> -> vector<8x128xf32>
    %c0_3 = arith.constant 0 : index
    %c0_4 = arith.constant 0 : index
    %3 = vector.load %arg3[%c0_3, %c0_4] : memref<1x128xf32, #tpu.memory_space<vmem>>, vector<1x128xf32>
    %4 = vector.broadcast %3 : vector<1x128xf32> to vector<8x128xf32>
    %5 = arith.addf %2, %4 : vector<8x128xf32>
    %cst_5 = arith.constant 0.000000e+00 : f32
    %6 = vector.broadcast %cst_5 : f32 to vector<8x128xf32>
    %7 = arith.maximumf %5, %6 : vector<8x128xf32>
    %c0_6 = arith.constant 0 : index
    %c0_7 = arith.constant 0 : index
    %8 = vector.load %arg4[%c0_6, %c0_7] : memref<128x128xf32, #tpu.memory_space<vmem>>, vector<128x128xf32>
    %cst_8 = arith.constant dense<0.000000e+00> : vector<8x128xf32>
    %9 = tpu.matmul %7, %8, %cst_8 {dimension_numbers = #tpu.dot_dimension_numbers<[1], [0], [0], [1], [0, 0, 1, 1], [], []>} : vector<8x128xf32>, vector<128x128xf32>, vector<8x128xf32> -> vector<8x128xf32>
    %c0_9 = arith.constant 0 : index
    %c0_10 = arith.constant 0 : index
    %10 = vector.load %arg5[%c0_9, %c0_10] : memref<1x128xf32, #tpu.memory_space<vmem>>, vector<1x128xf32>
    %11 = vector.broadcast %10 : vector<1x128xf32> to vector<8x128xf32>
    %12 = arith.addf %9, %11 : vector<8x128xf32>
    %cst_11 = arith.constant 0.000000e+00 : f32
    %13 = vector.broadcast %cst_11 : f32 to vector<8x128xf32>
    %14 = arith.maximumf %12, %13 : vector<8x128xf32>
    %c0_12 = arith.constant 0 : index
    %c0_13 = arith.constant 0 : index
    %15 = vector.load %arg6[%c0_12, %c0_13] : memref<128x10xf32, #tpu.memory_space<vmem>>, vector<128x10xf32>
    %cst_14 = arith.constant dense<0.000000e+00> : vector<8x10xf32>
    %16 = tpu.matmul %14, %15, %cst_14 {dimension_numbers = #tpu.dot_dimension_numbers<[1], [0], [0], [1], [0, 0, 1, 1], [], []>} : vector<8x128xf32>, vector<128x10xf32>, vector<8x10xf32> -> vector<8x10xf32>
    %c0_15 = arith.constant 0 : index
    %c0_16 = arith.constant 0 : index
    %17 = vector.load %arg7[%c0_15, %c0_16] : memref<1x10xf32, #tpu.memory_space<vmem>>, vector<1x10xf32>
    %18 = vector.broadcast %17 : vector<1x10xf32> to vector<8x10xf32>
    %19 = arith.addf %16, %18 : vector<8x10xf32>
    %cst_17 = arith.constant 0.000000e+00 : f32
    %20 = vector.broadcast %cst_17 : f32 to vector<8x10xf32>
    %21 = arith.maximumf %19, %20 : vector<8x10xf32>
    %c0_18 = arith.constant 0 : index
    %c0_19 = arith.constant 0 : index
    %22 = vector.load %arg8[%c0_18, %c0_19] : memref<10x4xf32, #tpu.memory_space<vmem>>, vector<10x4xf32>
    %cst_20 = arith.constant dense<0.000000e+00> : vector<8x4xf32>
    %23 = tpu.matmul %21, %22, %cst_20 {dimension_numbers = #tpu.dot_dimension_numbers<[1], [0], [0], [1], [0, 0, 1, 1], [], []>} : vector<8x10xf32>, vector<10x4xf32>, vector<8x4xf32> -> vector<8x4xf32>
    %c0_21 = arith.constant 0 : index
    %c0_22 = arith.constant 0 : index
    %24 = vector.load %arg9[%c0_21, %c0_22] : memref<1x4xf32, #tpu.memory_space<vmem>>, vector<1x4xf32>
    %25 = vector.broadcast %24 : vector<1x4xf32> to vector<8x4xf32>
    %26 = arith.addf %23, %25 : vector<8x4xf32>
    %c0_23 = arith.constant 0 : index
    %c0_24 = arith.constant 0 : index
    %27 = vector.load %arg10[%c0_23, %c0_24] : memref<8x4xf32, #tpu.memory_space<vmem>>, vector<8x4xf32>
    tpu.vector_store %arg10[%c0_23, %c0_24], %26 {strides = array<i32>} : memref<8x4xf32, #tpu.memory_space<vmem>>, vector<8x4xf32>,
    return
  }
  func.func @transform_0(%arg0: i32) -> (i32, i32) {
    %c0_i32 = arith.constant 0 : i32
    %c0_i32_0 = arith.constant 0 : i32
    return %arg0, %c0_i32 : i32, i32
  }
  func.func @transform_1(%arg0: i32) -> (i32, i32) {
    %c0_i32 = arith.constant 0 : i32
    %c0_i32_0 = arith.constant 0 : i32
    %c0_i32_1 = arith.constant 0 : i32
    return %c0_i32, %c0_i32_0 : i32, i32
  }
  func.func @transform_2(%arg0: i32) -> (i32, i32) {
    %c0_i32 = arith.constant 0 : i32
    %c0_i32_0 = arith.constant 0 : i32
    %c0_i32_1 = arith.constant 0 : i32
    return %c0_i32, %c0_i32_0 : i32, i32
  }
  func.func @transform_3(%arg0: i32) -> (i32, i32) {
    %c0_i32 = arith.constant 0 : i32
    %c0_i32_0 = arith.constant 0 : i32
    %c0_i32_1 = arith.constant 0 : i32
    return %c0_i32, %c0_i32_0 : i32, i32
  }
  func.func @transform_4(%arg0: i32) -> (i32, i32) {
    %c0_i32 = arith.constant 0 : i32
    %c0_i32_0 = arith.constant 0 : i32
    %c0_i32_1 = arith.constant 0 : i32
    return %c0_i32, %c0_i32_0 : i32, i32
  }
  func.func @transform_5(%arg0: i32) -> (i32, i32) {
    %c0_i32 = arith.constant 0 : i32
    %c0_i32_0 = arith.constant 0 : i32
    %c0_i32_1 = arith.constant 0 : i32
    return %c0_i32, %c0_i32_0 : i32, i32
  }
  func.func @transform_6(%arg0: i32) -> (i32, i32) {
    %c0_i32 = arith.constant 0 : i32
    %c0_i32_0 = arith.constant 0 : i32
    %c0_i32_1 = arith.constant 0 : i32
    return %c0_i32, %c0_i32_0 : i32, i32
  }
  func.func @transform_7(%arg0: i32) -> (i32, i32) {
    %c0_i32 = arith.constant 0 : i32
    %c0_i32_0 = arith.constant 0 : i32
    %c0_i32_1 = arith.constant 0 : i32
    return %c0_i32, %c0_i32_0 : i32, i32
  }
  func.func @transform_8(%arg0: i32) -> (i32, i32) {
    %c0_i32 = arith.constant 0 : i32
    %c0_i32_0 = arith.constant 0 : i32
    %c0_i32_1 = arith.constant 0 : i32
    return %c0_i32, %c0_i32_0 : i32, i32
  }
  func.func @transform_9(%arg0: i32) -> (i32, i32) {
    %c0_i32 = arith.constant 0 : i32
    %c0_i32_0 = arith.constant 0 : i32
    return %arg0, %c0_i32 : i32, i32
  }
}

</mosaic_0001>

<llo_original>
// kernel: _pallas_forward.1
$region0: #{_pallas_forward.1}
  #allocation0 [shape = 'u32[]', space=smem, size = 0x4, offset = 0x4, fixed_abs, tag = 'smem constant byte address 0x4 - core index']
  #allocation1 [shape = 'u32[144,128]{1,0:T(1,128)}', space=vmem, size = 0x12000, scoped, tag = 'internal scratch']
  %s0 = inlined_call_operand.vmem [shape: f32[8,16], index: 0, kind: input, shape index: {}]
  %s1 = inlined_call_operand.vmem [shape: f32[16,128], index: 1, kind: input, shape index: {}]
  %s2 = inlined_call_operand.vmem [shape: f32[1,128], index: 2, kind: input, shape index: {}]
  %s3 = inlined_call_operand.vmem [shape: f32[128,128], index: 3, kind: input, shape index: {}]
  %s4 = inlined_call_operand.vmem [shape: f32[1,128], index: 4, kind: input, shape index: {}]
  %s5 = inlined_call_operand.vmem [shape: f32[128,10], index: 5, kind: input, shape index: {}]
  %s6 = inlined_call_operand.vmem [shape: f32[1,10], index: 6, kind: input, shape index: {}]
  %s7 = inlined_call_operand.vmem [shape: f32[10,4], index: 7, kind: input, shape index: {}]
  %s8 = inlined_call_operand.vmem [shape: f32[1,4], index: 8, kind: input, shape index: {}]
  %s9 = inlined_call_operand.vmem [shape: f32[8,4], index: 9, kind: output, shape index: {}]
  %s10 = sld [smem:[#allocation0]]
  $region46: #{_pallas_forward.1} parent=0
    _
  %s12 = ssub.s32 1, %s10
  %s13 = scalar_select 0, %s12, %s10
  // Predicated region
  $region2: #{_pallas_forward.1} parent=0 // pred_check
    _
  $region3: #{_pallas_forward.1} parent=0 // pred_check_branch
    %15 = sbr.rel (0) target = $region5
  $region4: #{_pallas_forward.1} parent=0 // pred_region
    _
  $region5: #{_pallas_forward.1} parent=0 // pred_fallthru
    _
  // Predicated region
  $region6: #{_pallas_forward.1} parent=0 // pred_check
    _
  $region7: #{_pallas_forward.1} parent=0 // pred_check_branch
    %17 = sbr.rel (0) target = $region9
  $region8: #{_pallas_forward.1} parent=0 // pred_region
    _
  $region9: #{_pallas_forward.1} parent=0 // pred_fallthru
    _
  // Predicated region
  $region10: #{_pallas_forward.1} parent=0 // pred_check
    _
  $region11: #{_pallas_forward.1} parent=0 // pred_check_branch
    %19 = sbr.rel (0) target = $region13
  $region12: #{_pallas_forward.1} parent=0 // pred_region
    _
  $region13: #{_pallas_forward.1} parent=0 // pred_fallthru
    _
  // Predicated region
  $region14: #{_pallas_forward.1} parent=0 // pred_check
    _
  $region15: #{_pallas_forward.1} parent=0 // pred_check_branch
    %21 = sbr.rel (0) target = $region17
  $region16: #{_pallas_forward.1} parent=0 // pred_region
    _
  $region17: #{_pallas_forward.1} parent=0 // pred_fallthru
    _
  // Predicated region
  $region18: #{_pallas_forward.1} parent=0 // pred_check
    _
  $region19: #{_pallas_forward.1} parent=0 // pred_check_branch
    %23 = sbr.rel (0) target = $region21
  $region20: #{_pallas_forward.1} parent=0 // pred_region
    _
  $region21: #{_pallas_forward.1} parent=0 // pred_fallthru
    _
  // Predicated region
  $region22: #{_pallas_forward.1} parent=0 // pred_check
    _
  $region23: #{_pallas_forward.1} parent=0 // pred_check_branch
    %25 = sbr.rel (0) target = $region25
  $region24: #{_pallas_forward.1} parent=0 // pred_region
    _
  $region25: #{_pallas_forward.1} parent=0 // pred_fallthru
    _
  // Predicated region
  $region26: #{_pallas_forward.1} parent=0 // pred_check
    _
  $region27: #{_pallas_forward.1} parent=0 // pred_check_branch
    %27 = sbr.rel (0) target = $region29
  $region28: #{_pallas_forward.1} parent=0 // pred_region
    _
  $region29: #{_pallas_forward.1} parent=0 // pred_fallthru
    _
  // Predicated region
  $region30: #{_pallas_forward.1} parent=0 // pred_check
    _
  $region31: #{_pallas_forward.1} parent=0 // pred_check_branch
    %29 = sbr.rel (0) target = $region33
  $region32: #{_pallas_forward.1} parent=0 // pred_region
    _
  $region33: #{_pallas_forward.1} parent=0 // pred_fallthru
    _
  // Predicated region
  $region34: #{_pallas_forward.1} parent=0 // pred_check
    _
  $region35: #{_pallas_forward.1} parent=0 // pred_check_branch
    %31 = sbr.rel (0) target = $region37
  $region36: #{_pallas_forward.1} parent=0 // pred_region
    _
  $region37: #{_pallas_forward.1} parent=0 // pred_fallthru
    _
  %v32 = vld [vmem:[%s0] sm:$0xff]
  %v33 = vld [vmem:[%s1] sm:$0xff]
  %v34 = vld [vmem:[%s1 + $0x8] sm:$0xff]
  %v35 = vld [vmem:[%s2] sm:$0x1]
  %v37 = vlaneseq
  %v38 = vshrl.u32 %v37, 7
  %v39 = vsub.s32 0, %v38
  %v40 = vrot.slane %v35, %v39
  %vm42 = vcmask 130048
  %v44 = vsel %vm42, %v32, 0
  %46 = vmatprep.subr.mxu0 0.0
  %47 = vmatpush1.msra.mxu0 %v33
  %48 = vmatprep.subr.mxu0 0.0
  %49 = vmatpush1.msra.mxu0 %v34
  %50 = vmatprep.subr.mxu0 0.0
  %51 = vmatpush1.msra.mxu0 0.0
  %52 = vmatprep.subr.mxu0 0.0
  %53 = vmatpush1.msra.mxu0 0.0
  %54 = vmatprep.subr.mxu0 0.0
  %55 = vmatpush1.msra.mxu0 0.0
  %56 = vmatprep.subr.mxu0 0.0
  %57 = vmatpush1.msra.mxu0 0.0
  %58 = vmatprep.subr.mxu0 0.0
  %59 = vmatpush1.msra.mxu0 0.0
  %60 = vmatprep.subr.mxu0 0.0
  %61 = vmatpush1.msra.mxu0 0.0
  %62 = vmatprep.subr.mxu0 0.0
  %63 = vmatpush1.msra.mxu0 0.0
  %64 = vmatprep.subr.mxu0 0.0
  %65 = vmatpush1.msra.mxu0 0.0
  %66 = vmatprep.subr.mxu0 0.0
  %67 = vmatpush1.msra.mxu0 0.0
  %68 = vmatprep.subr.mxu0 0.0
  %69 = vmatpush1.msra.mxu0 0.0
  %70 = vmatprep.subr.mxu0 0.0
  %71 = vmatpush1.msra.mxu0 0.0
  %72 = vmatprep.subr.mxu0 0.0
  %73 = vmatpush1.msra.mxu0 0.0
  %74 = vmatprep.subr.mxu0 0.0
  %75 = vmatpush1.msra.mxu0 0.0
  %76 = vmatprep.subr.mxu0 0.0
  %77 = vmatpush1.msra.mxu0 0.0
  %78 = vmatprep.subr.mxu0 0.0
  %79 = vmatpush1.msra.mxu0 0.0
  %80 = vmatprep.subr.mxu0 0.0
  %81 = vmatpush1.msra.mxu0 0.0
  %82 = vmatprep.subr.mxu0 0.0
  %83 = vmatpush1.msra.mxu0 0.0
  %84 = vmatprep.subr.mxu0 0.0
  %85 = vmatpush1.msra.mxu0 0.0
  %86 = vmatprep.subr.mxu0 0.0
  %87 = vmatpush1.msra.mxu0 0.0
  %88 = vmatprep.subr.mxu0 0.0
  %89 = vmatpush1.msra.mxu0 0.0
  %90 = vmatprep.subr.mxu0 0.0
  %91 = vmatpush1.msra.mxu0 0.0
  %92 = vmatprep.subr.mxu0 0.0
  %93 = vmatpush1.msra.mxu0 0.0
  %94 = vmatprep.subr.mxu0 0.0
  %95 = vmatpush1.msra.mxu0 0.0
  %96 = vmatprep.subr.mxu0 0.0
  %97 = vmatpush1.msra.mxu0 0.0
  %98 = vmatprep.subr.mxu0 0.0
  %99 = vmatpush1.msra.mxu0 0.0
  %100 = vmatprep.subr.mxu0 0.0
  %101 = vmatpush1.msra.mxu0 0.0
  %102 = vmatprep.subr.mxu0 0.0
  %103 = vmatpush1.msra.mxu0 0.0
  %104 = vmatprep.subr.mxu0 0.0
  %105 = vmatpush1.msra.mxu0 0.0
  %106 = vmatprep.subr.mxu0 0.0
  %107 = vmatpush1.msra.mxu0 0.0
  %108 = vmatprep.subr.mxu0 0.0
  %109 = vmatpush1.msra.mxu0 0.0
  %110 = vmatprep.mubr.f32.mxu0 0.0
  %111 = vmatmul.mubr.f32.gmra.mrb[0].mxu0 %v44
  %v112 = vpop.f32.mrb[0].mxu0
  %v113 = vadd.f32 %v40, %v112
  %v114 = vpop.f32.mrb[0].mxu0
  %115 = vdwg.mxu0
  %v116 = vmax.f32 %v113, 0.0
  %v117 = vld [vmem:[%s3] sm:$0xff]
  %v118 = vld [vmem:[%s3 + $0x8] sm:$0xff]
  %v119 = vld [vmem:[%s3 + $0x10] sm:$0xff]
  %v120 = vld [vmem:[%s3 + $0x18] sm:$0xff]
  %v121 = vld [vmem:[%s3 + $0x20] sm:$0xff]
  %v122 = vld [vmem:[%s3 + $0x28] sm:$0xff]
  %v123 = vld [vmem:[%s3 + $0x30] sm:$0xff]
  %v124 = vld [vmem:[%s3 + $0x38] sm:$0xff]
  %v125 = vld [vmem:[%s3 + $0x40] sm:$0xff]
  %v126 = vld [vmem:[%s3 + $0x48] sm:$0xff]
  %v127 = vld [vmem:[%s3 + $0x50] sm:$0xff]
  %v128 = vld [vmem:[%s3 + $0x58] sm:$0xff]
  %v129 = vld [vmem:[%s3 + $0x60] sm:$0xff]
  %v130 = vld [vmem:[%s3 + $0x68] sm:$0xff]
  %v131 = vld [vmem:[%s3 + $0x70] sm:$0xff]
  %v132 = vld [vmem:[%s3 + $0x78] sm:$0xff]
  %v133 = vld [vmem:[%s4] sm:$0x1]
  %v135 = vlaneseq
  %v136 = vshrl.u32 %v135, 7
  %v137 = vsub.s32 0, %v136
  %v138 = vrot.slane %v133, %v137
  %140 = vmatprep.subr.mxu0 0.0
  %141 = vmatpush1.msra.mxu0 %v117
  %142 = vmatprep.subr.mxu0 0.0
  %143 = vmatpush1.msra.mxu0 %v118
  %144 = vmatprep.subr.mxu0 0.0
  %145 = vmatpush1.msra.mxu0 %v119
  %146 = vmatprep.subr.mxu0 0.0
  %147 = vmatpush1.msra.mxu0 %v120
  %148 = vmatprep.subr.mxu0 0.0
  %149 = vmatpush1.msra.mxu0 %v121
  %150 = vmatprep.subr.mxu0 0.0
  %151 = vmatpush1.msra.mxu0 %v122
  %152 = vmatprep.subr.mxu0 0.0
  %153 = vmatpush1.msra.mxu0 %v123
  %154 = vmatprep.subr.mxu0 0.0
  %155 = vmatpush1.msra.mxu0 %v124
  %156 = vmatprep.subr.mxu0 0.0
  %157 = vmatpush1.msra.mxu0 %v125
  %158 = vmatprep.subr.mxu0 0.0
  %159 = vmatpush1.msra.mxu0 %v126
  %160 = vmatprep.subr.mxu0 0.0
  %161 = vmatpush1.msra.mxu0 %v127
  %162 = vmatprep.subr.mxu0 0.0
  %163 = vmatpush1.msra.mxu0 %v128
  %164 = vmatprep.subr.mxu0 0.0
  %165 = vmatpush1.msra.mxu0 %v129
  %166 = vmatprep.subr.mxu0 0.0
  %167 = vmatpush1.msra.mxu0 %v130
  %168 = vmatprep.subr.mxu0 0.0
  %169 = vmatpush1.msra.mxu0 %v131
  %170 = vmatprep.subr.mxu0 0.0
  %171 = vmatpush1.msra.mxu0 %v132
  %172 = vmatprep.subr.mxu0 0.0
  %173 = vmatpush1.msra.mxu0 0.0
  %174 = vmatprep.subr.mxu0 0.0
  %175 = vmatpush1.msra.mxu0 0.0
  %176 = vmatprep.subr.mxu0 0.0
  %177 = vmatpush1.msra.mxu0 0.0
  %178 = vmatprep.subr.mxu0 0.0
  %179 = vmatpush1.msra.mxu0 0.0
  %180 = vmatprep.subr.mxu0 0.0
  %181 = vmatpush1.msra.mxu0 0.0
  %182 = vmatprep.subr.mxu0 0.0
  %183 = vmatpush1.msra.mxu0 0.0
  %184 = vmatprep.subr.mxu0 0.0
  %185 = vmatpush1.msra.mxu0 0.0
  %186 = vmatprep.subr.mxu0 0.0
  %187 = vmatpush1.msra.mxu0 0.0
  %188 = vmatprep.subr.mxu0 0.0
  %189 = vmatpush1.msra.mxu0 0.0
  %190 = vmatprep.subr.mxu0 0.0
  %191 = vmatpush1.msra.mxu0 0.0
  %192 = vmatprep.subr.mxu0 0.0
  %193 = vmatpush1.msra.mxu0 0.0
  %194 = vmatprep.subr.mxu0 0.0
  %195 = vmatpush1.msra.mxu0 0.0
  %196 = vmatprep.subr.mxu0 0.0
  %197 = vmatpush1.msra.mxu0 0.0
  %198 = vmatprep.subr.mxu0 0.0
  %199 = vmatpush1.msra.mxu0 0.0
  %200 = vmatprep.subr.mxu0 0.0
  %201 = vmatpush1.msra.mxu0 0.0
  %202 = vmatprep.subr.mxu0 0.0
  %203 = vmatpush1.msra.mxu0 0.0
  %204 = vmatprep.mubr.f32.mxu0 0.0
  %205 = vmatmul.mubr.f32.gmra.mrb[0].mxu0 %v116
  %v206 = vpop.f32.mrb[0].mxu0
  %v207 = vadd.f32 %v138, %v206
  %v208 = vpop.f32.mrb[0].mxu0
  %209 = vdwg.mxu0
  %v210 = vmax.f32 %v207, 0.0
  %v211 = vld [vmem:[%s5] sm:$0xff]
  %v212 = vld [vmem:[%s5 + $0x8] sm:$0xff]
  %v213 = vld [vmem:[%s5 + $0x10] sm:$0xff]
  %v214 = vld [vmem:[%s5 + $0x18] sm:$0xff]
  %v215 = vld [vmem:[%s5 + $0x20] sm:$0xff]
  %v216 = vld [vmem:[%s5 + $0x28] sm:$0xff]
  %v217 = vld [vmem:[%s5 + $0x30] sm:$0xff]
  %v218 = vld [vmem:[%s5 + $0x38] sm:$0xff]
  %v219 = vld [vmem:[%s5 + $0x40] sm:$0xff]
  %v220 = vld [vmem:[%s5 + $0x48] sm:$0xff]
  %v221 = vld [vmem:[%s5 + $0x50] sm:$0xff]
  %v222 = vld [vmem:[%s5 + $0x58] sm:$0xff]
  %v223 = vld [vmem:[%s5 + $0x60] sm:$0xff]
  %v224 = vld [vmem:[%s5 + $0x68] sm:$0xff]
  %v225 = vld [vmem:[%s5 + $0x70] sm:$0xff]
  %v226 = vld [vmem:[%s5 + $0x78] sm:$0xff]
  %v227 = vld [vmem:[%s6] sm:$0x1]
  %v229 = vlaneseq
  %v230 = vshrl.u32 %v229, 7
  %v231 = vsub.s32 0, %v230
  %v232 = vrot.slane %v227, %v231
  %234 = vmatprep.subr.mxu0 0.0
  %235 = vmatpush1.msra.mxu0 %v211
  %236 = vmatprep.subr.mxu0 0.0
  %237 = vmatpush1.msra.mxu0 %v212
  %238 = vmatprep.subr.mxu0 0.0
  %239 = vmatpush1.msra.mxu0 %v213
  %240 = vmatprep.subr.mxu0 0.0
  %241 = vmatpush1.msra.mxu0 %v214
  %242 = vmatprep.subr.mxu0 0.0
  %243 = vmatpush1.msra.mxu0 %v215
  %244 = vmatprep.subr.mxu0 0.0
  %245 = vmatpush1.msra.mxu0 %v216
  %246 = vmatprep.subr.mxu0 0.0
  %247 = vmatpush1.msra.mxu0 %v217
  %248 = vmatprep.subr.mxu0 0.0
  %249 = vmatpush1.msra.mxu0 %v218
  %250 = vmatprep.subr.mxu0 0.0
  %251 = vmatpush1.msra.mxu0 %v219
  %252 = vmatprep.subr.mxu0 0.0
  %253 = vmatpush1.msra.mxu0 %v220
  %254 = vmatprep.subr.mxu0 0.0
  %255 = vmatpush1.msra.mxu0 %v221
  %256 = vmatprep.subr.mxu0 0.0
  %257 = vmatpush1.msra.mxu0 %v222
  %258 = vmatprep.subr.mxu0 0.0
  %259 = vmatpush1.msra.mxu0 %v223
  %260 = vmatprep.subr.mxu0 0.0
  %261 = vmatpush1.msra.mxu0 %v224
  %262 = vmatprep.subr.mxu0 0.0
  %263 = vmatpush1.msra.mxu0 %v225
  %264 = vmatprep.subr.mxu0 0.0
  %265 = vmatpush1.msra.mxu0 %v226
  %266 = vmatprep.subr.mxu0 0.0
  %267 = vmatpush1.msra.mxu0 0.0
  %268 = vmatprep.subr.mxu0 0.0
  %269 = vmatpush1.msra.mxu0 0.0
  %270 = vmatprep.subr.mxu0 0.0
  %271 = vmatpush1.msra.mxu0 0.0
  %272 = vmatprep.subr.mxu0 0.0
  %273 = vmatpush1.msra.mxu0 0.0
  %274 = vmatprep.subr.mxu0 0.0
  %275 = vmatpush1.msra.mxu0 0.0
  %276 = vmatprep.subr.mxu0 0.0
  %277 = vmatpush1.msra.mxu0 0.0
  %278 = vmatprep.subr.mxu0 0.0
  %279 = vmatpush1.msra.mxu0 0.0
  %280 = vmatprep.subr.mxu0 0.0
  %281 = vmatpush1.msra.mxu0 0.0
  %282 = vmatprep.subr.mxu0 0.0
  %283 = vmatpush1.msra.mxu0 0.0
  %284 = vmatprep.subr.mxu0 0.0
  %285 = vmatpush1.msra.mxu0 0.0
  %286 = vmatprep.subr.mxu0 0.0
  %287 = vmatpush1.msra.mxu0 0.0
  %288 = vmatprep.subr.mxu0 0.0
  %289 = vmatpush1.msra.mxu0 0.0
  %290 = vmatprep.subr.mxu0 0.0
  %291 = vmatpush1.msra.mxu0 0.0
  %292 = vmatprep.subr.mxu0 0.0
  %293 = vmatpush1.msra.mxu0 0.0
  %294 = vmatprep.subr.mxu0 0.0
  %295 = vmatpush1.msra.mxu0 0.0
  %296 = vmatprep.subr.mxu0 0.0
  %297 = vmatpush1.msra.mxu0 0.0
  %298 = vmatprep.mubr.f32.mxu0 0.0
  %299 = vmatmul.mubr.f32.gmra.mrb[0].mxu0 %v210
  %v300 = vpop.f32.mrb[0].mxu0
  %v301 = vadd.f32 %v232, %v300
  %v302 = vpop.f32.mrb[0].mxu0
  %303 = vdwg.mxu0
  %v304 = vmax.f32 %v301, 0.0
  %v305 = vld [vmem:[%s7] sm:$0xff]
  %v306 = vld [vmem:[%s7 + $0x8] sm:$0x3]
  %v307 = vld [vmem:[%s8] sm:$0x1]
  %v309 = vlaneseq
  %v310 = vshrl.u32 %v309, 7
  %v311 = vsub.s32 0, %v310
  %v312 = vrot.slane %v307, %v311
  %vm314 = vcmask 80896
  %v316 = vsel %vm314, %v304, 0
  %vm318 = vcmask 1041408
  %v320 = vsel %vm318, %v306, 0
  %322 = vmatprep.subr.mxu0 0.0
  %323 = vmatpush1.msra.mxu0 %v305
  %324 = vmatprep.subr.mxu0 0.0
  %325 = vmatpush1.msra.mxu0 %v320
  %326 = vmatprep.subr.mxu0 0.0
  %327 = vmatpush1.msra.mxu0 0.0
  %328 = vmatprep.subr.mxu0 0.0
  %329 = vmatpush1.msra.mxu0 0.0
  %330 = vmatprep.subr.mxu0 0.0
  %331 = vmatpush1.msra.mxu0 0.0
  %332 = vmatprep.subr.mxu0 0.0
  %333 = vmatpush1.msra.mxu0 0.0
  %334 = vmatprep.subr.mxu0 0.0
  %335 = vmatpush1.msra.mxu0 0.0
  %336 = vmatprep.subr.mxu0 0.0
  %337 = vmatpush1.msra.mxu0 0.0
  %338 = vmatprep.subr.mxu0 0.0
  %339 = vmatpush1.msra.mxu0 0.0
  %340 = vmatprep.subr.mxu0 0.0
  %341 = vmatpush1.msra.mxu0 0.0
  %342 = vmatprep.subr.mxu0 0.0
  %343 = vmatpush1.msra.mxu0 0.0
  %344 = vmatprep.subr.mxu0 0.0
  %345 = vmatpush1.msra.mxu0 0.0
  %346 = vmatprep.subr.mxu0 0.0
  %347 = vmatpush1.msra.mxu0 0.0
  %348 = vmatprep.subr.mxu0 0.0
  %349 = vmatpush1.msra.mxu0 0.0
  %350 = vmatprep.subr.mxu0 0.0
  %351 = vmatpush1.msra.mxu0 0.0
  %352 = vmatprep.subr.mxu0 0.0
  %353 = vmatpush1.msra.mxu0 0.0
  %354 = vmatprep.subr.mxu0 0.0
  %355 = vmatpush1.msra.mxu0 0.0
  %356 = vmatprep.subr.mxu0 0.0
  %357 = vmatpush1.msra.mxu0 0.0
  %358 = vmatprep.subr.mxu0 0.0
  %359 = vmatpush1.msra.mxu0 0.0
  %360 = vmatprep.subr.mxu0 0.0
  %361 = vmatpush1.msra.mxu0 0.0
  %362 = vmatprep.subr.mxu0 0.0
  %363 = vmatpush1.msra.mxu0 0.0
  %364 = vmatprep.subr.mxu0 0.0
  %365 = vmatpush1.msra.mxu0 0.0
  %366 = vmatprep.subr.mxu0 0.0
  %367 = vmatpush1.msra.mxu0 0.0
  %368 = vmatprep.subr.mxu0 0.0
  %369 = vmatpush1.msra.mxu0 0.0
  %370 = vmatprep.subr.mxu0 0.0
  %371 = vmatpush1.msra.mxu0 0.0
  %372 = vmatprep.subr.mxu0 0.0
  %373 = vmatpush1.msra.mxu0 0.0
  %374 = vmatprep.subr.mxu0 0.0
  %375 = vmatpush1.msra.mxu0 0.0
  %376 = vmatprep.subr.mxu0 0.0
  %377 = vmatpush1.msra.mxu0 0.0
  %378 = vmatprep.subr.mxu0 0.0
  %379 = vmatpush1.msra.mxu0 0.0
  %380 = vmatprep.subr.mxu0 0.0
  %381 = vmatpush1.msra.mxu0 0.0
  %382 = vmatprep.subr.mxu0 0.0
  %383 = vmatpush1.msra.mxu0 0.0
  %384 = vmatprep.subr.mxu0 0.0
  %385 = vmatpush1.msra.mxu0 0.0
  %386 = vmatprep.mubr.f32.mxu0 0.0
  %387 = vmatmul.mubr.f32.gmra.mrb[0].mxu0 %v316
  %v388 = vpop.f32.mrb[0].mxu0
  %v389 = vadd.f32 %v312, %v388
  %v390 = vpop.f32.mrb[0].mxu0
  %391 = vdwg.mxu0
  %vm392 = vcmask 31744
  %393 = vst.msk [vmem:[%s9] sm:$0xff] %vm392, %v389
  // Predicated region
  $region38: #{_pallas_forward.1} parent=0 // pred_check
    _
  $region39: #{_pallas_forward.1} parent=0 // pred_check_branch
    %395 = sbr.rel (0) target = $region41
  $region40: #{_pallas_forward.1} parent=0 // pred_region
    _
  $region41: #{_pallas_forward.1} parent=0 // pred_fallthru
    _
  // Predicated region
  $region42: #{_pallas_forward.1} parent=0 // pred_check
    _
  $region43: #{_pallas_forward.1} parent=0 // pred_check_branch
    %397 = sbr.rel (0) target = $region45
  $region44: #{_pallas_forward.1} parent=0 // pred_region
    _
  $region45: #{_pallas_forward.1} parent=0 // pred_fallthru
    _

</llo_original>
